<compile_context>
chip_gen: v7x
topology: tpu7x:2x2x1
jax: 0.10.0
libtpu: 0.0.40
codegen_flags: <defaults>
</compile_context>

<pallas_src>
import functools

import jax
import jax.numpy as jnp
from jax import lax
from jax.experimental import pallas as pl
from jax.experimental.pallas import tpu as pltpu


def _conv3x3_relu_kernel(x_ref, w_ref, b_ref, o_ref, xp_ref, *,
                         B, H, W, Cout, LPAD):
    """Single grid step over the whole (tiny) batch.

    x_ref:  (B, 1, H*W)              flattened NCHW input (Cin squeezed), VMEM
    w_ref:  (Cout, 9)                conv weights, tap-major (kh*3 + kw), VMEM
    b_ref:  (Cout, 1)                conv bias, VMEM
    o_ref:  (B, Cout, H*W)           lane-dense output, VMEM
    xp_ref: (B, Cout, LPAD+H*W+W+1)  f32 scratch: zero-halo'd image replicated
                                     across the Cout sublanes (written once)
    """
    P = H * W

    # Zero only the halo slices; the middle P lanes are overwritten below.
    xp_ref[:, :, 0:LPAD] = jnp.zeros((B, Cout, LPAD), jnp.float32)
    xp_ref[:, :, LPAD + P:] = jnp.zeros(
        (B, Cout, xp_ref.shape[-1] - LPAD - P), jnp.float32)

    # Replicate the image across the Cout sublanes exactly once.  Every tap
    # below is then a pure slice + mul + add on full-occupancy vregs.
    xp_ref[:, :, LPAD:LPAD + P] = jnp.broadcast_to(
        x_ref[...].astype(jnp.float32), (B, Cout, P))

    # Row-edge masks for the horizontal +/-1 taps, materialized once at the
    # accumulator shape (no repeated broadcasts inside the unrolled loop).
    iota = lax.broadcasted_iota(jnp.int32, (B, Cout, P), 2)
    if (W & (W - 1)) == 0:
        col = iota & (W - 1)
    else:
        col = iota % W
    not_left_edge = col != 0            # valid lanes for dx = -1 taps
    not_right_edge = col != (W - 1)     # valid lanes for dx = +1 taps

    # Initialise the accumulator with the broadcast bias (saves a full pass).
    acc = jnp.broadcast_to(
        b_ref[...].astype(jnp.float32)[None, :, :], (B, Cout, P))

    # 9-tap direct convolution as VPU broadcast-MACs over (B, Cout, H*W).
    for dy in (-1, 0, 1):
        for dx in (-1, 0, 1):
            tap = (dy + 1) * 3 + (dx + 1)
            start = LPAD + dy * W + dx
            patch = xp_ref[:, :, start:start + P]          # (B, Cout, P)
            if dx == -1:
                patch = jnp.where(not_left_edge, patch, 0.0)
            elif dx == 1:
                patch = jnp.where(not_right_edge, patch, 0.0)
            w_tap = w_ref[:, tap:tap + 1][None, :, :]      # (1, Cout, 1)
            acc = acc + patch * w_tap                      # -> (B, Cout, P)

    o_ref[...] = jnp.maximum(acc, 0.0).astype(o_ref.dtype)   # ReLU + store


def ptn_pre_add_channel_axis_forward(inputs, w_oihw, b, out_dtype=None):
    """Equivalent of PtnPreAddChannelAxisDef.forward with the inner model
    being Conv2d(1, Cout, 3, padding=1) + ReLU.

    inputs:    rank-3 (bs, h, w) or rank-4 NCHW (bs, 1, h, w)
    w_oihw:    (Cout, 1, 3, 3)  -- PyTorch-native Conv2d weight layout
    b:         (Cout,)
    out_dtype: optional (e.g. jnp.bfloat16 on v6e/v7x to halve store traffic)
    Returns NCHW output (bs, Cout, h, w).
    """
    if inputs.ndim not in (3, 4):
        raise ValueError("Inputs is not a rank 3 or 4 tensor.")
    if inputs.ndim == 3:
        x = inputs[:, None, :, :]          # add channel axis after batch
    else:
        x = inputs

    B, C, H, W = x.shape
    Cout, Cin, KH, KW = w_oihw.shape
    assert (C, Cin, KH, KW) == (1, 1, 3, 3), (
        "inner model expects a single input channel and a 3x3 kernel")

    P = H * W
    LPAD = 32                               # left halo, must be >= W + 1
    assert LPAD >= W + 1
    RPAD = W + 1                            # right halo (max tap shift)
    out_dtype = x.dtype if out_dtype is None else out_dtype

    # All host-side layout changes are free contiguous reshapes (no pads,
    # no transposes).
    x_flat = x.reshape(B, 1, P)
    w_flat = w_oihw.reshape(Cout, KH * KW)  # (Cout, 9), tap-major
    b_col = b.reshape(Cout, 1)

    kernel = functools.partial(
        _conv3x3_relu_kernel, B=B, H=H, W=W, Cout=Cout, LPAD=LPAD)

    itemsize = jnp.dtype(x.dtype).itemsize
    cost = pl.CostEstimate(
        flops=2 * B * Cout * P * KH * KW,
        transcendentals=0,
        bytes_accessed=(B * P * itemsize                      # input
                        + Cout * KH * KW * 4 + Cout * 4       # weights + bias
                        + B * Cout * P * jnp.dtype(out_dtype).itemsize))

    y_flat = pl.pallas_call(
        kernel,
        out_shape=jax.ShapeDtypeStruct((B, Cout, P), out_dtype),
        grid=(1,),                          # whole batch in one grid step
        in_specs=[
            pl.BlockSpec((B, 1, P), lambda i: (0, 0, 0)),
            pl.BlockSpec((Cout, KH * KW), lambda i: (0, 0)),
            pl.BlockSpec((Cout, 1), lambda i: (0, 0)),
        ],
        out_specs=pl.BlockSpec((B, Cout, P), lambda i: (0, 0, 0)),
        scratch_shapes=[pltpu.VMEM((B, Cout, LPAD + P + RPAD), jnp.float32)],
        compiler_params=pltpu.CompilerParams(
            dimension_semantics=("arbitrary",)),
        cost_estimate=cost,
    )(x_flat, w_flat, b_col)

    # Lane-dense (B, Cout, H*W) -> NCHW is a free reshape.
    return y_flat.reshape(B, Cout, H, W)


def _reference(inputs, w_oihw, b):
    """Pure-JAX reference using lax.conv for correctness checking."""
    if inputs.ndim == 3:
        x = inputs[:, None, :, :]
    else:
        x = inputs
    y = lax.conv_general_dilated(
        x, w_oihw, window_strides=(1, 1), padding="SAME",
        dimension_numbers=("NCHW", "OIHW", "NCHW"))
    y = y + b[None, :, None, None]
    return jnp.maximum(y, 0.0)


if __name__ == "__main__":
    key = jax.random.PRNGKey(0)
    k_in, k_w, k_b = jax.random.split(key, 3)

    B, H, W = 2, 16, 16
    Cin, Cout = 1, 8

    # rank-3 input (bs, h, w) -> wrapper adds the channel axis
    inputs = jax.random.normal(k_in, (B, H, W), dtype=jnp.float32)

    # deterministic synthetic parameters for the inner Conv2d(1, 8, 3, pad=1)
    # (PyTorch-native OIHW weight layout)
    w = jax.random.normal(k_w, (Cout, Cin, 3, 3), dtype=jnp.float32) * 0.1
    b = jax.random.normal(k_b, (Cout,), dtype=jnp.float32) * 0.1

    # rank-3 path (channel axis added by the wrapper)
    out = jax.block_until_ready(ptn_pre_add_channel_axis_forward(inputs, w, b))
    ref = jax.block_until_ready(_reference(inputs, w, b))
    assert out.shape == (B, Cout, H, W), out.shape
    assert jnp.allclose(out, ref, atol=1e-4, rtol=1e-4), "rank-3 mismatch"

    # rank-4 path (input already NCHW with a single channel)
    inputs4 = inputs[:, None, :, :]
    out4 = jax.block_until_ready(
        ptn_pre_add_channel_axis_forward(inputs4, w, b))
    assert out4.shape == (B, Cout, H, W), out4.shape
    assert jnp.allclose(out4, ref, atol=1e-4, rtol=1e-4), "rank-4 mismatch"

    print("KERNEL_OK")
</pallas_src>

<mosaic_0001>
module attributes {stable_mosaic.version = 11 : i64} {
  func.func @_conv3x3_relu_kernel(%arg0: i32, %arg1: memref<2x1x256xf32, #tpu.memory_space<vmem>>, %arg2: memref<8x9xf32, #tpu.memory_space<vmem>>, %arg3: memref<8x1xf32, #tpu.memory_space<vmem>>, %arg4: memref<2x8x256xf32, #tpu.memory_space<vmem>>, %arg5: memref<2x8x305xf32, #tpu.memory_space<vmem>>) attributes {dimension_semantics = [#tpu.dimension_semantics<arbitrary>], iteration_bounds = array<i64: 1>, scalar_prefetch = 0 : i64, scratch_operands = 1 : i64, tpu.core_type = #tpu.core_type<tc>, window_params = [{pipeline_mode = #tpu.pipeline_mode<synchronous>, transform_indices = @transform_0, window_bounds = array<i64: 2, 1, 256>}, {pipeline_mode = #tpu.pipeline_mode<synchronous>, transform_indices = @transform_1, window_bounds = array<i64: 8, 9>}, {pipeline_mode = #tpu.pipeline_mode<synchronous>, transform_indices = @transform_2, window_bounds = array<i64: 8, 1>}, {pipeline_mode = #tpu.pipeline_mode<synchronous>, transform_indices = @transform_3, window_bounds = array<i64: 2, 8, 256>}]} {
    %cst = arith.constant 0.000000e+00 : f32
    %0 = vector.broadcast %cst : f32 to vector<2x8x32xf32>
    %c0 = arith.constant 0 : index
    %c0_0 = arith.constant 0 : index
    %c0_1 = arith.constant 0 : index
    %1 = vector.load %arg5[%c0, %c0_0, %c0_1] : memref<2x8x305xf32, #tpu.memory_space<vmem>>, vector<2x8x32xf32>
    tpu.vector_store %arg5[%c0, %c0_0, %c0_1], %0 {strides = array<i32>} : memref<2x8x305xf32, #tpu.memory_space<vmem>>, vector<2x8x32xf32>,
    %cst_2 = arith.constant 0.000000e+00 : f32
    %2 = vector.broadcast %cst_2 : f32 to vector<2x8x17xf32>
    %c0_3 = arith.constant 0 : index
    %c0_4 = arith.constant 0 : index
    %c288 = arith.constant 288 : index
    %3 = vector.load %arg5[%c0_3, %c0_4, %c288] : memref<2x8x305xf32, #tpu.memory_space<vmem>>, vector<2x8x17xf32>
    tpu.vector_store %arg5[%c0_3, %c0_4, %c288], %2 {strides = array<i32>} : memref<2x8x305xf32, #tpu.memory_space<vmem>>, vector<2x8x17xf32>,
    %c0_5 = arith.constant 0 : index
    %c0_6 = arith.constant 0 : index
    %c0_7 = arith.constant 0 : index
    %4 = vector.load %arg1[%c0_5, %c0_6, %c0_7] : memref<2x1x256xf32, #tpu.memory_space<vmem>>, vector<2x1x256xf32>
    %5 = vector.shape_cast %4 : vector<2x1x256xf32> to vector<2x1x256xf32>
    %6 = vector.broadcast %5 : vector<2x1x256xf32> to vector<2x8x256xf32>
    %c0_8 = arith.constant 0 : index
    %c0_9 = arith.constant 0 : index
    %c32 = arith.constant 32 : index
    %7 = vector.load %arg5[%c0_8, %c0_9, %c32] : memref<2x8x305xf32, #tpu.memory_space<vmem>>, vector<2x8x256xf32>
    tpu.vector_store %arg5[%c0_8, %c0_9, %c32], %6 {strides = array<i32>} : memref<2x8x305xf32, #tpu.memory_space<vmem>>, vector<2x8x256xf32>,
    %8 = tpu.iota {dimensions = array<i32: 2>} : vector<2x8x256xi32>
    %c15_i32 = arith.constant 15 : i32
    %9 = vector.broadcast %c15_i32 : i32 to vector<2x8x256xi32>
    %10 = arith.andi %8, %9 : vector<2x8x256xi32>
    %c0_i32 = arith.constant 0 : i32
    %11 = vector.broadcast %c0_i32 : i32 to vector<2x8x256xi32>
    %12 = arith.cmpi ne, %10, %11 : vector<2x8x256xi32>
    %c15_i32_10 = arith.constant 15 : i32
    %13 = vector.broadcast %c15_i32_10 : i32 to vector<2x8x256xi32>
    %14 = arith.cmpi ne, %10, %13 : vector<2x8x256xi32>
    %c0_11 = arith.constant 0 : index
    %c0_12 = arith.constant 0 : index
    %15 = vector.load %arg3[%c0_11, %c0_12] : memref<8x1xf32, #tpu.memory_space<vmem>>, vector<8x1xf32>
    %16 = vector.shape_cast %15 : vector<8x1xf32> to vector<1x8x1xf32>
    %17 = vector.shape_cast %16 : vector<1x8x1xf32> to vector<1x8x1xf32>
    %18 = vector.broadcast %17 : vector<1x8x1xf32> to vector<2x8x256xf32>
    %c0_13 = arith.constant 0 : index
    %c0_14 = arith.constant 0 : index
    %c15 = arith.constant 15 : index
    %19 = vector.load %arg5[%c0_13, %c0_14, %c15] : memref<2x8x305xf32, #tpu.memory_space<vmem>>, vector<2x8x256xf32>
    %cst_15 = arith.constant 0.000000e+00 : f32
    %20 = vector.broadcast %cst_15 : f32 to vector<2x8x256xf32>
    %21 = arith.select %12, %19, %20 : vector<2x8x256xi1>, vector<2x8x256xf32>
    %c0_16 = arith.constant 0 : index
    %c0_17 = arith.constant 0 : index
    %22 = vector.load %arg2[%c0_16, %c0_17] : memref<8x9xf32, #tpu.memory_space<vmem>>, vector<8x1xf32>
    %23 = vector.shape_cast %22 : vector<8x1xf32> to vector<1x8x1xf32>
    %24 = vector.broadcast %23 : vector<1x8x1xf32> to vector<2x8x256xf32>
    %25 = arith.mulf %21, %24 : vector<2x8x256xf32>
    %26 = arith.addf %18, %25 : vector<2x8x256xf32>
    %c0_18 = arith.constant 0 : index
    %c0_19 = arith.constant 0 : index
    %c16 = arith.constant 16 : index
    %27 = vector.load %arg5[%c0_18, %c0_19, %c16] : memref<2x8x305xf32, #tpu.memory_space<vmem>>, vector<2x8x256xf32>
    %c0_20 = arith.constant 0 : index
    %c1 = arith.constant 1 : index
    %28 = vector.load %arg2[%c0_20, %c1] : memref<8x9xf32, #tpu.memory_space<vmem>>, vector<8x1xf32>
    %29 = vector.shape_cast %28 : vector<8x1xf32> to vector<1x8x1xf32>
    %30 = vector.broadcast %29 : vector<1x8x1xf32> to vector<2x8x256xf32>
    %31 = arith.mulf %27, %30 : vector<2x8x256xf32>
    %32 = arith.addf %26, %31 : vector<2x8x256xf32>
    %c0_21 = arith.constant 0 : index
    %c0_22 = arith.constant 0 : index
    %c17 = arith.constant 17 : index
    %33 = vector.load %arg5[%c0_21, %c0_22, %c17] : memref<2x8x305xf32, #tpu.memory_space<vmem>>, vector<2x8x256xf32>
    %cst_23 = arith.constant 0.000000e+00 : f32
    %34 = vector.broadcast %cst_23 : f32 to vector<2x8x256xf32>
    %35 = arith.select %14, %33, %34 : vector<2x8x256xi1>, vector<2x8x256xf32>
    %c0_24 = arith.constant 0 : index
    %c2 = arith.constant 2 : index
    %36 = vector.load %arg2[%c0_24, %c2] : memref<8x9xf32, #tpu.memory_space<vmem>>, vector<8x1xf32>
    %37 = vector.shape_cast %36 : vector<8x1xf32> to vector<1x8x1xf32>
    %38 = vector.broadcast %37 : vector<1x8x1xf32> to vector<2x8x256xf32>
    %39 = arith.mulf %35, %38 : vector<2x8x256xf32>
    %40 = arith.addf %32, %39 : vector<2x8x256xf32>
    %c0_25 = arith.constant 0 : index
    %c0_26 = arith.constant 0 : index
    %c31 = arith.constant 31 : index
    %41 = vector.load %arg5[%c0_25, %c0_26, %c31] : memref<2x8x305xf32, #tpu.memory_space<vmem>>, vector<2x8x256xf32>
    %cst_27 = arith.constant 0.000000e+00 : f32
    %42 = vector.broadcast %cst_27 : f32 to vector<2x8x256xf32>
    %43 = arith.select %12, %41, %42 : vector<2x8x256xi1>, vector<2x8x256xf32>
    %c0_28 = arith.constant 0 : index
    %c3 = arith.constant 3 : index
    %44 = vector.load %arg2[%c0_28, %c3] : memref<8x9xf32, #tpu.memory_space<vmem>>, vector<8x1xf32>
    %45 = vector.shape_cast %44 : vector<8x1xf32> to vector<1x8x1xf32>
    %46 = vector.broadcast %45 : vector<1x8x1xf32> to vector<2x8x256xf32>
    %47 = arith.mulf %43, %46 : vector<2x8x256xf32>
    %48 = arith.addf %40, %47 : vector<2x8x256xf32>
    %c0_29 = arith.constant 0 : index
    %c0_30 = arith.constant 0 : index
    %c32_31 = arith.constant 32 : index
    %49 = vector.load %arg5[%c0_29, %c0_30, %c32_31] : memref<2x8x305xf32, #tpu.memory_space<vmem>>, vector<2x8x256xf32>
    %c0_32 = arith.constant 0 : index
    %c4 = arith.constant 4 : index
    %50 = vector.load %arg2[%c0_32, %c4] : memref<8x9xf32, #tpu.memory_space<vmem>>, vector<8x1xf32>
    %51 = vector.shape_cast %50 : vector<8x1xf32> to vector<1x8x1xf32>
    %52 = vector.broadcast %51 : vector<1x8x1xf32> to vector<2x8x256xf32>
    %53 = arith.mulf %49, %52 : vector<2x8x256xf32>
    %54 = arith.addf %48, %53 : vector<2x8x256xf32>
    %c0_33 = arith.constant 0 : index
    %c0_34 = arith.constant 0 : index
    %c33 = arith.constant 33 : index
    %55 = vector.load %arg5[%c0_33, %c0_34, %c33] : memref<2x8x305xf32, #tpu.memory_space<vmem>>, vector<2x8x256xf32>
    %cst_35 = arith.constant 0.000000e+00 : f32
    %56 = vector.broadcast %cst_35 : f32 to vector<2x8x256xf32>
    %57 = arith.select %14, %55, %56 : vector<2x8x256xi1>, vector<2x8x256xf32>
    %c0_36 = arith.constant 0 : index
    %c5 = arith.constant 5 : index
    %58 = vector.load %arg2[%c0_36, %c5] : memref<8x9xf32, #tpu.memory_space<vmem>>, vector<8x1xf32>
    %59 = vector.shape_cast %58 : vector<8x1xf32> to vector<1x8x1xf32>
    %60 = vector.broadcast %59 : vector<1x8x1xf32> to vector<2x8x256xf32>
    %61 = arith.mulf %57, %60 : vector<2x8x256xf32>
    %62 = arith.addf %54, %61 : vector<2x8x256xf32>
    %c0_37 = arith.constant 0 : index
    %c0_38 = arith.constant 0 : index
    %c47 = arith.constant 47 : index
    %63 = vector.load %arg5[%c0_37, %c0_38, %c47] : memref<2x8x305xf32, #tpu.memory_space<vmem>>, vector<2x8x256xf32>
    %cst_39 = arith.constant 0.000000e+00 : f32
    %64 = vector.broadcast %cst_39 : f32 to vector<2x8x256xf32>
    %65 = arith.select %12, %63, %64 : vector<2x8x256xi1>, vector<2x8x256xf32>
    %c0_40 = arith.constant 0 : index
    %c6 = arith.constant 6 : index
    %66 = vector.load %arg2[%c0_40, %c6] : memref<8x9xf32, #tpu.memory_space<vmem>>, vector<8x1xf32>
    %67 = vector.shape_cast %66 : vector<8x1xf32> to vector<1x8x1xf32>
    %68 = vector.broadcast %67 : vector<1x8x1xf32> to vector<2x8x256xf32>
    %69 = arith.mulf %65, %68 : vector<2x8x256xf32>
    %70 = arith.addf %62, %69 : vector<2x8x256xf32>
    %c0_41 = arith.constant 0 : index
    %c0_42 = arith.constant 0 : index
    %c48 = arith.constant 48 : index
    %71 = vector.load %arg5[%c0_41, %c0_42, %c48] : memref<2x8x305xf32, #tpu.memory_space<vmem>>, vector<2x8x256xf32>
    %c0_43 = arith.constant 0 : index
    %c7 = arith.constant 7 : index
    %72 = vector.load %arg2[%c0_43, %c7] : memref<8x9xf32, #tpu.memory_space<vmem>>, vector<8x1xf32>
    %73 = vector.shape_cast %72 : vector<8x1xf32> to vector<1x8x1xf32>
    %74 = vector.broadcast %73 : vector<1x8x1xf32> to vector<2x8x256xf32>
    %75 = arith.mulf %71, %74 : vector<2x8x256xf32>
    %76 = arith.addf %70, %75 : vector<2x8x256xf32>
    %c0_44 = arith.constant 0 : index
    %c0_45 = arith.constant 0 : index
    %c49 = arith.constant 49 : index
    %77 = vector.load %arg5[%c0_44, %c0_45, %c49] : memref<2x8x305xf32, #tpu.memory_space<vmem>>, vector<2x8x256xf32>
    %cst_46 = arith.constant 0.000000e+00 : f32
    %78 = vector.broadcast %cst_46 : f32 to vector<2x8x256xf32>
    %79 = arith.select %14, %77, %78 : vector<2x8x256xi1>, vector<2x8x256xf32>
    %c0_47 = arith.constant 0 : index
    %c8 = arith.constant 8 : index
    %80 = vector.load %arg2[%c0_47, %c8] : memref<8x9xf32, #tpu.memory_space<vmem>>, vector<8x1xf32>
    %81 = vector.shape_cast %80 : vector<8x1xf32> to vector<1x8x1xf32>
    %82 = vector.broadcast %81 : vector<1x8x1xf32> to vector<2x8x256xf32>
    %83 = arith.mulf %79, %82 : vector<2x8x256xf32>
    %84 = arith.addf %76, %83 : vector<2x8x256xf32>
    %cst_48 = arith.constant 0.000000e+00 : f32
    %85 = vector.broadcast %cst_48 : f32 to vector<2x8x256xf32>
    %86 = arith.maximumf %84, %85 : vector<2x8x256xf32>
    %c0_49 = arith.constant 0 : index
    %c0_50 = arith.constant 0 : index
    %c0_51 = arith.constant 0 : index
    %87 = vector.load %arg4[%c0_49, %c0_50, %c0_51] : memref<2x8x256xf32, #tpu.memory_space<vmem>>, vector<2x8x256xf32>
    tpu.vector_store %arg4[%c0_49, %c0_50, %c0_51], %86 {strides = array<i32>} : memref<2x8x256xf32, #tpu.memory_space<vmem>>, vector<2x8x256xf32>,
    return
  }
  func.func @transform_0(%arg0: i32) -> (i32, i32, i32) {
    %c0_i32 = arith.constant 0 : i32
    %c0_i32_0 = arith.constant 0 : i32
    %c0_i32_1 = arith.constant 0 : i32
    %c0_i32_2 = arith.constant 0 : i32
    return %c0_i32, %c0_i32_0, %c0_i32_1 : i32, i32, i32
  }
  func.func @transform_1(%arg0: i32) -> (i32, i32) {
    %c0_i32 = arith.constant 0 : i32
    %c0_i32_0 = arith.constant 0 : i32
    %c0_i32_1 = arith.constant 0 : i32
    return %c0_i32, %c0_i32_0 : i32, i32
  }
  func.func @transform_2(%arg0: i32) -> (i32, i32) {
    %c0_i32 = arith.constant 0 : i32
    %c0_i32_0 = arith.constant 0 : i32
    %c0_i32_1 = arith.constant 0 : i32
    return %c0_i32, %c0_i32_0 : i32, i32
  }
  func.func @transform_3(%arg0: i32) -> (i32, i32, i32) {
    %c0_i32 = arith.constant 0 : i32
    %c0_i32_0 = arith.constant 0 : i32
    %c0_i32_1 = arith.constant 0 : i32
    %c0_i32_2 = arith.constant 0 : i32
    return %c0_i32, %c0_i32_0, %c0_i32_1 : i32, i32, i32
  }
}

</mosaic_0001>

<llo_original>
// kernel: tpu_custom_call.1
$region0: #{tpu_custom_call.1}
  #allocation0 [shape = 'u32[]', space=smem, size = 0x4, offset = 0x4, fixed_abs, tag = 'smem constant byte address 0x4 - core index']
  #allocation1 [shape = 'u32[144,128]{1,0:T(1,128)}', space=vmem, size = 0x12000, scoped, tag = 'internal scratch']
  #allocation2 [shape = 'f32[2,8,305]{2,1,0:T(8,128)}', space=vmem, size = 0x6000, scoped, tag = 'scratch operand']
  %s0 = inlined_call_operand.vmem [shape: f32[2,1,256], index: 0, kind: input, shape index: {}]
  %s1 = inlined_call_operand.vmem [shape: f32[8,9], index: 1, kind: input, shape index: {}]
  %s2 = inlined_call_operand.vmem [shape: f32[8,1], index: 2, kind: input, shape index: {}]
  %s3 = inlined_call_operand.hbm [shape: f32[2,8,256], index: 3, kind: output, shape index: {}]
  %s4 = sld [smem:[#allocation0]]
  $region22: #{tpu_custom_call.1} parent=0
    _
  %s6 = ssub.s32 1, %s4
  %s7 = scalar_select 0, %s6, %s4
  $region1: #{tpu_custom_call.1} parent=0
    #allocation3 [shape = 'u8[16384]{0}', space=vmem, size = 0x4000, scoped, tag = 'output window, operand 0, single buffered']
    #allocation4 [shape = 's32[1]{0}', space=sflag, size = 0x4, scoped, tag = 'scoped memory for tpu_custom_call.1']
    %8 = vsyncpa [#allocation4], 0
    // Predicated region
    $region2: #{tpu_custom_call.1} parent=1 // pred_check
      _
    $region3: #{tpu_custom_call.1} parent=1 // pred_check_branch
      %10 = sbr.rel (0) target = $region5
    $region4: #{tpu_custom_call.1} parent=1 // pred_region
      _
    $region5: #{tpu_custom_call.1} parent=1 // pred_fallthru
      _
    // Predicated region
    $region6: #{tpu_custom_call.1} parent=1 // pred_check
      _
    $region7: #{tpu_custom_call.1} parent=1 // pred_check_branch
      %12 = sbr.rel (0) target = $region9
    $region8: #{tpu_custom_call.1} parent=1 // pred_region
      _
    $region9: #{tpu_custom_call.1} parent=1 // pred_fallthru
      _
    // Predicated region
    $region10: #{tpu_custom_call.1} parent=1 // pred_check
      _
    $region11: #{tpu_custom_call.1} parent=1 // pred_check_branch
      %14 = sbr.rel (0) target = $region13
    $region12: #{tpu_custom_call.1} parent=1 // pred_region
      _
    $region13: #{tpu_custom_call.1} parent=1 // pred_fallthru
      _
    %vm15 = vcmask 261120
    %16 = vst.msk [vmem:[#allocation2] sm:$0xff] %vm15, 0.0
    %17 = vst.msk [vmem:[#allocation2 + $0x18] sm:$0xff] %vm15, 0.0
    %vm18 = vcmask 400640
    %19 = vst.msk [vmem:[#allocation2 + $0x10] sm:$0xff] %vm18, 0.0
    %20 = vst.msk [vmem:[#allocation2 + $0x28] sm:$0xff] %vm18, 0.0
    %v21 = vld [vmem:[%s0] sm:$0x3]
    %v22 = vld [vmem:[%s0 + $0x2] sm:$0x3]
    %v25 = vlaneseq
    %v26 = vshrl.u32 %v25, 7
    %v27 = vsub.s32 0, %v26
    %v28 = vrot.slane %v21, %v27
    %v29 = vlaneseq
    %v30 = vshrl.u32 %v29, 7
    %v31 = vsub.s32 1, %v30
    %v32 = vrot.slane %v21, %v31
    %v33 = vlaneseq
    %v34 = vshrl.u32 %v33, 7
    %v35 = vsub.s32 0, %v34
    %v36 = vrot.slane %v22, %v35
    %v37 = vlaneseq
    %v38 = vshrl.u32 %v37, 7
    %v39 = vsub.s32 1, %v38
    %v40 = vrot.slane %v22, %v39
    %41 = vrot.lane.b32.xlu0 %v28, 32
    %v42 = vpop.permute.xlu0 %41
    %43 = vrot.lane.b32.xlu0 %v32, 32
    %v44 = vpop.permute.xlu0 %43
    %45 = vrot.lane.b32.xlu0 %v36, 32
    %v46 = vpop.permute.xlu0 %45
    %47 = vrot.lane.b32.xlu0 %v40, 32
    %v48 = vpop.permute.xlu0 %47
    %v49 = vsel %vm15, %v42, %v44
    %v50 = vsel %vm15, %v46, %v48
    %vm57 = vcmask 1047808
    %58 = vst.msk [vmem:[#allocation2] sm:$0xff] %vm57, %v42
    %59 = vst [vmem:[#allocation2 + $0x8] sm:$0xff] %v49
    %60 = vst.msk [vmem:[#allocation2 + $0x10] sm:$0xff] %vm15, %v44
    %61 = vst.msk [vmem:[#allocation2 + $0x18] sm:$0xff] %vm57, %v46
    %62 = vst [vmem:[#allocation2 + $0x20] sm:$0xff] %v50
    %63 = vst.msk [vmem:[#allocation2 + $0x28] sm:$0xff] %vm15, %v48
    %v64 = vlaneseq
    %v65 = vand.u32 %v64, 127
    %v66 = vadd.s32 %v65, 128
    %v67 = vand.u32 %v65, 15
    %v68 = vand.u32 %v66, 15
    %vm69 = vcmp.ne.s32.totalorder %v67, 0
    %vm70 = vcmp.ne.s32.totalorder %v68, 0
    %vm71 = vcmp.ne.s32.totalorder %v67, 15
    %vm72 = vcmp.ne.s32.totalorder %v68, 15
    %v73 = vld [vmem:[%s2] sm:$0xff]
    %75 = vset.pattern.permute.xlu0 0
    %76 = vperm.xlu0 %75, %v73
    %v77 = vpop.permute.xlu0 %76
    %v79 = vld [vmem:[#allocation2] sm:$0xff]
    %v80 = vld [vmem:[#allocation2 + $0x8] sm:$0xff]
    %v81 = vld [vmem:[#allocation2 + $0x10] sm:$0xff]
    %v82 = vld [vmem:[#allocation2 + $0x18] sm:$0xff]
    %v83 = vld [vmem:[#allocation2 + $0x20] sm:$0xff]
    %v84 = vld [vmem:[#allocation2 + $0x28] sm:$0xff]
    %91 = vrot.lane.b32.xlu0 %v79, 113
    %v92 = vpop.permute.xlu0 %91
    %93 = vrot.lane.b32.xlu0 %v80, 113
    %v94 = vpop.permute.xlu0 %93
    %95 = vrot.lane.b32.xlu0 %v81, 113
    %v96 = vpop.permute.xlu0 %95
    %97 = vrot.lane.b32.xlu0 %v82, 113
    %v98 = vpop.permute.xlu0 %97
    %99 = vrot.lane.b32.xlu0 %v83, 113
    %v100 = vpop.permute.xlu0 %99
    %101 = vrot.lane.b32.xlu0 %v84, 113
    %v102 = vpop.permute.xlu0 %101
    %vm103 = vcmask 924672
    %v104 = vsel %vm103, %v92, %v94
    %v105 = vsel %vm103, %v94, %v96
    %v106 = vsel %vm103, %v98, %v100
    %v107 = vsel %vm103, %v100, %v102
    %v112 = vsel %vm69, %v104, 0.0
    %v113 = vsel %vm70, %v105, 0.0
    %v114 = vsel %vm69, %v106, 0.0
    %v115 = vsel %vm70, %v107, 0.0
    %v116 = vld [vmem:[%s1] sm:$0xff]
    %118 = vset.pattern.permute.xlu0 0
    %119 = vperm.xlu0 %118, %v116
    %v120 = vpop.permute.xlu0 %119
    %v122 = vmul.f32 %v112, %v120
    %v123 = vmul.f32 %v113, %v120
    %v124 = vmul.f32 %v114, %v120
    %v125 = vmul.f32 %v115, %v120
    %v126 = vadd.f32 %v77, %v122
    %v127 = vadd.f32 %v77, %v123
    %v128 = vadd.f32 %v77, %v124
    %v129 = vadd.f32 %v77, %v125
    %130 = vset.pattern.permute.xlu0 1
    %131 = vperm.xlu0 %130, %v116
    %v132 = vpop.permute.xlu0 %131
    %v134 = vmul.f32 %v79, %v132
    %v135 = vmul.f32 %v80, %v132
    %v136 = vmul.f32 %v81, %v132
    %v137 = vmul.f32 %v82, %v132
    %v138 = vmul.f32 %v83, %v132
    %v139 = vmul.f32 %v84, %v132
    %146 = vrot.lane.b32.xlu0 %v134, 112
    %v147 = vpop.permute.xlu0 %146
    %148 = vrot.lane.b32.xlu0 %v135, 112
    %v149 = vpop.permute.xlu0 %148
    %150 = vrot.lane.b32.xlu0 %v136, 112
    %v151 = vpop.permute.xlu0 %150
    %152 = vrot.lane.b32.xlu0 %v137, 112
    %v153 = vpop.permute.xlu0 %152
    %154 = vrot.lane.b32.xlu0 %v138, 112
    %v155 = vpop.permute.xlu0 %154
    %156 = vrot.lane.b32.xlu0 %v139, 112
    %v157 = vpop.permute.xlu0 %156
    %vm158 = vcmask 916480
    %v159 = vsel %vm158, %v147, %v149
    %v160 = vsel %vm158, %v149, %v151
    %v161 = vsel %vm158, %v153, %v155
    %v162 = vsel %vm158, %v155, %v157
    %v167 = vadd.f32 %v126, %v159
    %v168 = vadd.f32 %v127, %v160
    %v169 = vadd.f32 %v128, %v161
    %v170 = vadd.f32 %v129, %v162
    %171 = vrot.lane.b32.xlu0 %v79, 111
    %v172 = vpop.permute.xlu0 %171
    %173 = vrot.lane.b32.xlu0 %v80, 111
    %v174 = vpop.permute.xlu0 %173
    %175 = vrot.lane.b32.xlu0 %v81, 111
    %v176 = vpop.permute.xlu0 %175
    %177 = vrot.lane.b32.xlu0 %v82, 111
    %v178 = vpop.permute.xlu0 %177
    %179 = vrot.lane.b32.xlu0 %v83, 111
    %v180 = vpop.permute.xlu0 %179
    %181 = vrot.lane.b32.xlu0 %v84, 111
    %v182 = vpop.permute.xlu0 %181
    %vm183 = vcmask 908288
    %v184 = vsel %vm183, %v172, %v174
    %v185 = vsel %vm183, %v174, %v176
    %v186 = vsel %vm183, %v178, %v180
    %v187 = vsel %vm183, %v180, %v182
    %v192 = vsel %vm71, %v184, 0.0
    %v193 = vsel %vm72, %v185, 0.0
    %v194 = vsel %vm71, %v186, 0.0
    %v195 = vsel %vm72, %v187, 0.0
    %196 = vset.pattern.permute.xlu0 2
    %197 = vperm.xlu0 %196, %v116
    %v198 = vpop.permute.xlu0 %197
    %v200 = vmul.f32 %v192, %v198
    %v201 = vmul.f32 %v193, %v198
    %v202 = vmul.f32 %v194, %v198
    %v203 = vmul.f32 %v195, %v198
    %v204 = vadd.f32 %v167, %v200
    %v205 = vadd.f32 %v168, %v201
    %v206 = vadd.f32 %v169, %v202
    %v207 = vadd.f32 %v170, %v203
    %208 = vrot.lane.b32.xlu0 %v79, 97
    %v209 = vpop.permute.xlu0 %208
    %210 = vrot.lane.b32.xlu0 %v80, 97
    %v211 = vpop.permute.xlu0 %210
    %212 = vrot.lane.b32.xlu0 %v81, 97
    %v213 = vpop.permute.xlu0 %212
    %214 = vrot.lane.b32.xlu0 %v82, 97
    %v215 = vpop.permute.xlu0 %214
    %216 = vrot.lane.b32.xlu0 %v83, 97
    %v217 = vpop.permute.xlu0 %216
    %218 = vrot.lane.b32.xlu0 %v84, 97
    %v219 = vpop.permute.xlu0 %218
    %vm220 = vcmask 793600
    %v221 = vsel %vm220, %v209, %v211
    %v222 = vsel %vm220, %v211, %v213
    %v223 = vsel %vm220, %v215, %v217
    %v224 = vsel %vm220, %v217, %v219
    %v229 = vsel %vm69, %v221, 0.0
    %v230 = vsel %vm70, %v222, 0.0
    %v231 = vsel %vm69, %v223, 0.0
    %v232 = vsel %vm70, %v224, 0.0
    %233 = vset.pattern.permute.xlu0 3
    %234 = vperm.xlu0 %233, %v116
    %v235 = vpop.permute.xlu0 %234
    %v237 = vmul.f32 %v229, %v235
    %v238 = vmul.f32 %v230, %v235
    %v239 = vmul.f32 %v231, %v235
    %v240 = vmul.f32 %v232, %v235
    %v241 = vadd.f32 %v204, %v237
    %v242 = vadd.f32 %v205, %v238
    %v243 = vadd.f32 %v206, %v239
    %v244 = vadd.f32 %v207, %v240
    %245 = vset.pattern.permute.xlu0 4
    %246 = vperm.xlu0 %245, %v116
    %v247 = vpop.permute.xlu0 %246
    %v249 = vmul.f32 %v79, %v247
    %v250 = vmul.f32 %v80, %v247
    %v251 = vmul.f32 %v81, %v247
    %v252 = vmul.f32 %v82, %v247
    %v253 = vmul.f32 %v83, %v247
    %v254 = vmul.f32 %v84, %v247
    %261 = vrot.lane.b32.xlu0 %v249, 96
    %v262 = vpop.permute.xlu0 %261
    %263 = vrot.lane.b32.xlu0 %v250, 96
    %v264 = vpop.permute.xlu0 %263
    %265 = vrot.lane.b32.xlu0 %v251, 96
    %v266 = vpop.permute.xlu0 %265
    %267 = vrot.lane.b32.xlu0 %v252, 96
    %v268 = vpop.permute.xlu0 %267
    %269 = vrot.lane.b32.xlu0 %v253, 96
    %v270 = vpop.permute.xlu0 %269
    %271 = vrot.lane.b32.xlu0 %v254, 96
    %v272 = vpop.permute.xlu0 %271
    %vm273 = vcmask 785408
    %v274 = vsel %vm273, %v262, %v264
    %v275 = vsel %vm273, %v264, %v266
    %v276 = vsel %vm273, %v268, %v270
    %v277 = vsel %vm273, %v270, %v272
    %v282 = vadd.f32 %v241, %v274
    %v283 = vadd.f32 %v242, %v275
    %v284 = vadd.f32 %v243, %v276
    %v285 = vadd.f32 %v244, %v277
    %286 = vrot.lane.b32.xlu0 %v79, 95
    %v287 = vpop.permute.xlu0 %286
    %288 = vrot.lane.b32.xlu0 %v80, 95
    %v289 = vpop.permute.xlu0 %288
    %290 = vrot.lane.b32.xlu0 %v81, 95
    %v291 = vpop.permute.xlu0 %290
    %292 = vrot.lane.b32.xlu0 %v82, 95
    %v293 = vpop.permute.xlu0 %292
    %294 = vrot.lane.b32.xlu0 %v83, 95
    %v295 = vpop.permute.xlu0 %294
    %296 = vrot.lane.b32.xlu0 %v84, 95
    %v297 = vpop.permute.xlu0 %296
    %vm298 = vcmask 777216
    %v299 = vsel %vm298, %v287, %v289
    %v300 = vsel %vm298, %v289, %v291
    %v301 = vsel %vm298, %v293, %v295
    %v302 = vsel %vm298, %v295, %v297
    %v307 = vsel %vm71, %v299, 0.0
    %v308 = vsel %vm72, %v300, 0.0
    %v309 = vsel %vm71, %v301, 0.0
    %v310 = vsel %vm72, %v302, 0.0
    %311 = vset.pattern.permute.xlu0 5
    %312 = vperm.xlu0 %311, %v116
    %v313 = vpop.permute.xlu0 %312
    %v315 = vmul.f32 %v307, %v313
    %v316 = vmul.f32 %v308, %v313
    %v317 = vmul.f32 %v309, %v313
    %v318 = vmul.f32 %v310, %v313
    %v319 = vadd.f32 %v282, %v315
    %v320 = vadd.f32 %v283, %v316
    %v321 = vadd.f32 %v284, %v317
    %v322 = vadd.f32 %v285, %v318
    %323 = vrot.lane.b32.xlu0 %v79, 81
    %v324 = vpop.permute.xlu0 %323
    %325 = vrot.lane.b32.xlu0 %v80, 81
    %v326 = vpop.permute.xlu0 %325
    %327 = vrot.lane.b32.xlu0 %v81, 81
    %v328 = vpop.permute.xlu0 %327
    %329 = vrot.lane.b32.xlu0 %v82, 81
    %v330 = vpop.permute.xlu0 %329
    %331 = vrot.lane.b32.xlu0 %v83, 81
    %v332 = vpop.permute.xlu0 %331
    %333 = vrot.lane.b32.xlu0 %v84, 81
    %v334 = vpop.permute.xlu0 %333
    %vm335 = vcmask 662528
    %v336 = vsel %vm335, %v324, %v326
    %v337 = vsel %vm335, %v326, %v328
    %v338 = vsel %vm335, %v330, %v332
    %v339 = vsel %vm335, %v332, %v334
    %v344 = vsel %vm69, %v336, 0.0
    %v345 = vsel %vm70, %v337, 0.0
    %v346 = vsel %vm69, %v338, 0.0
    %v347 = vsel %vm70, %v339, 0.0
    %348 = vset.pattern.permute.xlu0 6
    %349 = vperm.xlu0 %348, %v116
    %v350 = vpop.permute.xlu0 %349
    %v352 = vmul.f32 %v344, %v350
    %v353 = vmul.f32 %v345, %v350
    %v354 = vmul.f32 %v346, %v350
    %v355 = vmul.f32 %v347, %v350
    %v356 = vadd.f32 %v319, %v352
    %v357 = vadd.f32 %v320, %v353
    %v358 = vadd.f32 %v321, %v354
    %v359 = vadd.f32 %v322, %v355
    %360 = vset.pattern.permute.xlu0 7
    %361 = vperm.xlu0 %360, %v116
    %v362 = vpop.permute.xlu0 %361
    %v364 = vmul.f32 %v79, %v362
    %v365 = vmul.f32 %v80, %v362
    %v366 = vmul.f32 %v81, %v362
    %v367 = vmul.f32 %v82, %v362
    %v368 = vmul.f32 %v83, %v362
    %v369 = vmul.f32 %v84, %v362
    %376 = vrot.lane.b32.xlu0 %v364, 80
    %v377 = vpop.permute.xlu0 %376
    %378 = vrot.lane.b32.xlu0 %v365, 80
    %v379 = vpop.permute.xlu0 %378
    %380 = vrot.lane.b32.xlu0 %v366, 80
    %v381 = vpop.permute.xlu0 %380
    %382 = vrot.lane.b32.xlu0 %v367, 80
    %v383 = vpop.permute.xlu0 %382
    %384 = vrot.lane.b32.xlu0 %v368, 80
    %v385 = vpop.permute.xlu0 %384
    %386 = vrot.lane.b32.xlu0 %v369, 80
    %v387 = vpop.permute.xlu0 %386
    %vm388 = vcmask 654336
    %v389 = vsel %vm388, %v377, %v379
    %v390 = vsel %vm388, %v379, %v381
    %v391 = vsel %vm388, %v383, %v385
    %v392 = vsel %vm388, %v385, %v387
    %v397 = vadd.f32 %v356, %v389
    %v398 = vadd.f32 %v357, %v390
    %v399 = vadd.f32 %v358, %v391
    %v400 = vadd.f32 %v359, %v392
    %401 = vrot.lane.b32.xlu0 %v79, 79
    %v402 = vpop.permute.xlu0 %401
    %403 = vrot.lane.b32.xlu0 %v80, 79
    %v404 = vpop.permute.xlu0 %403
    %405 = vrot.lane.b32.xlu0 %v81, 79
    %v406 = vpop.permute.xlu0 %405
    %407 = vrot.lane.b32.xlu0 %v82, 79
    %v408 = vpop.permute.xlu0 %407
    %409 = vrot.lane.b32.xlu0 %v83, 79
    %v410 = vpop.permute.xlu0 %409
    %411 = vrot.lane.b32.xlu0 %v84, 79
    %v412 = vpop.permute.xlu0 %411
    %vm413 = vcmask 646144
    %v414 = vsel %vm413, %v402, %v404
    %v415 = vsel %vm413, %v404, %v406
    %v416 = vsel %vm413, %v408, %v410
    %v417 = vsel %vm413, %v410, %v412
    %v422 = vsel %vm71, %v414, 0.0
    %v423 = vsel %vm72, %v415, 0.0
    %v424 = vsel %vm71, %v416, 0.0
    %v425 = vsel %vm72, %v417, 0.0
    %426 = vset.pattern.permute.xlu0 8
    %427 = vperm.xlu0 %426, %v116
    %v428 = vpop.permute.xlu0 %427
    %v430 = vmul.f32 %v422, %v428
    %v431 = vmul.f32 %v423, %v428
    %v432 = vmul.f32 %v424, %v428
    %v433 = vmul.f32 %v425, %v428
    %v434 = vadd.f32 %v397, %v430
    %v435 = vadd.f32 %v398, %v431
    %v436 = vadd.f32 %v399, %v432
    %v437 = vadd.f32 %v400, %v433
    %v438 = vmax.f32 %v434, 0.0
    %v439 = vmax.f32 %v435, 0.0
    %v440 = vmax.f32 %v436, 0.0
    %v441 = vmax.f32 %v437, 0.0
    %442 = vst [vmem:[#allocation3] sm:$0xff] %v438
    %443 = vst [vmem:[#allocation3 + $0x8] sm:$0xff] %v439
    %444 = vst [vmem:[#allocation3 + $0x10] sm:$0xff] %v440
    %445 = vst [vmem:[#allocation3 + $0x18] sm:$0xff] %v441
    // Predicated region
    $region14: #{tpu_custom_call.1} parent=1 // pred_check
      _
    $region15: #{tpu_custom_call.1} parent=1 // pred_check_branch
      %447 = sbr.rel (0) target = $region17
    $region16: #{tpu_custom_call.1} parent=1 // pred_region
      %s449 = ssub.s32 512, 512
      %450 = vsyncadd [#allocation4], %s449
      %s451 = sshll.u32 [#allocation3], 4
      %s452 = int_to_ptr.vmem [resolvable:$true] %s451
      %457 = dma.vmem_to_hbm [thread:$0]  %s452, 512, %s3, [#allocation4], 256, 256, 16
    $region17: #{tpu_custom_call.1} parent=1 // pred_fallthru
      _
    // Predicated region
    $region18: #{tpu_custom_call.1} parent=1 // pred_check
      _
    $region19: #{tpu_custom_call.1} parent=1 // pred_check_branch
      %459 = sbr.rel (0) target = $region21
    $region20: #{tpu_custom_call.1} parent=1 // pred_region
      %460 = dma.done [#allocation4], 512
    $region21: #{tpu_custom_call.1} parent=1 // pred_fallthru
      _
    %461 = vsyncpa [#allocation4], 1

</llo_original>
